<compile_context>
chip_gen: v7x
topology: tpu7x:2x2x1
jax: 0.10.0
libtpu: 0.0.40
codegen_flags: <defaults>
</compile_context>

<pallas_src>
import functools

import jax
import jax.numpy as jnp
from jax import lax
from jax.experimental import pallas as pl
from jax.experimental.pallas import tpu as pltpu


# ---------------------------------------------------------------------------
# Hardware-aware planning
# ---------------------------------------------------------------------------
def _hw_info():
    """Best-effort VMEM-capacity / chip-generation detection with safe fallbacks."""
    vmem_cap = None
    try:
        info = pltpu.get_tpu_info()
        cap = int(getattr(info, "vmem_capacity_bytes", 0) or 0)
        vmem_cap = cap if cap > 0 else None
    except Exception:
        vmem_cap = None
    kind = ""
    try:
        kind = str(jax.devices()[0].device_kind).lower()
    except Exception:
        pass
    is_v7 = ("v7" in kind) or ("7x" in kind)
    if vmem_cap is None:
        vmem_cap = (64 << 20) if is_v7 else (128 << 20)
    return vmem_cap, is_v7


def _plan(c, l, itemsize):
    vmem_cap, is_v7 = _hw_info()
    big_vmem = vmem_cap >= (100 << 20)          # v5e / v6e: 128 MiB per core

    if big_vmem:
        per_buffer = 24 << 20                   # big tiles -> few grid steps
        vmem_limit_cap = 96 << 20
        num_buffers = 2
    else:                                       # v7x-class: 64 MiB per core
        per_buffer = 8 << 20
        vmem_limit_cap = 44 << 20
        num_buffers = 3 if is_v7 else 2         # deeper pipeline on fast HBM

    max_tile_l = 32768
    tile_cap = max(128, ((per_buffer // max(1, c * itemsize)) // 128) * 128)
    tile_l = int(min(max_tile_l, tile_cap))
    tile_l = int(min(tile_l, pl.cdiv(l, 128) * 128))    # never wider than padded L
    kt_total = int(pl.cdiv(l, tile_l))

    num_cores = 2 if is_v7 else 1
    num_splits = num_cores if (num_cores > 1 and kt_total >= num_cores) else 1
    kt = int(pl.cdiv(kt_total, num_splits))

    est = num_buffers * c * tile_l * itemsize + 6 * c * c * 4 + (4 << 20)
    vmem_limit = int(min(max(est + est // 4, 32 << 20), vmem_limit_cap))

    return dict(tile_l=tile_l, kt_total=kt_total, num_splits=num_splits, kt=kt,
                num_buffers=num_buffers, vmem_limit=vmem_limit, is_v7=is_v7)


def _feature_spec(c, tile_l, index_map, num_buffers):
    kwargs = {}
    if num_buffers > 2 and hasattr(pl, "Buffered"):
        kwargs["pipeline_mode"] = pl.Buffered(num_buffers)
    return pl.BlockSpec((c, tile_l), index_map, **kwargs)


# ---------------------------------------------------------------------------
# Kernel bodies
# ---------------------------------------------------------------------------
def _masked_tile(xf_ref, tile_idx, *, total_l, tile_l, needs_mask):
    """Load the (C, tile_l) tile; zero columns past the true L (no HBM padding)."""
    f = xf_ref[...]
    if needs_mask:
        remaining = total_l - tile_idx * tile_l          # dynamic scalar
        col = lax.broadcasted_iota(jnp.int32, f.shape, 1)
        f = jnp.where(col < remaining, f, jnp.zeros_like(f))
    return f


def _gram_loss_kernel(xf_ref, sg_ref, gram_ref, loss_ref, acc_ref,
                      *, total_l, tile_l, inv_factor, inv_n, needs_mask):
    """Fused: gram accumulation over L + (in epilogue) scale, diff, scalar MSE."""
    k = pl.program_id(0)

    @pl.when(k == 0)
    def _():
        acc_ref[...] = jnp.zeros_like(acc_ref)

    f = _masked_tile(xf_ref, k, total_l=total_l, tile_l=tile_l,
                     needs_mask=needs_mask)
    acc_ref[...] += lax.dot_general(
        f, f,
        dimension_numbers=(((1,), (1,)), ((), ())),      # NT: contract over L
        preferred_element_type=jnp.float32,
    )

    @pl.when(k == pl.num_programs(0) - 1)
    def _():
        gram = acc_ref[...] * inv_factor
        gram_ref[...] = gram.astype(gram_ref.dtype)
        diff = sg_ref[...].astype(jnp.float32) - gram
        loss_ref[...] = jnp.sum(diff * diff, axis=(0, 1), keepdims=True) * inv_n


def _partial_gram_kernel(xf_ref, pg_ref, acc_ref,
                         *, total_l, tile_l, kt, needs_mask):
    """Per-split partial gram (multi-TensorCore path)."""
    p = pl.program_id(0)
    k = pl.program_id(1)

    @pl.when(k == 0)
    def _():
        acc_ref[...] = jnp.zeros_like(acc_ref)

    f = _masked_tile(xf_ref, p * kt + k, total_l=total_l, tile_l=tile_l,
                     needs_mask=needs_mask)
    acc_ref[...] += lax.dot_general(
        f, f,
        dimension_numbers=(((1,), (1,)), ((), ())),
        preferred_element_type=jnp.float32,
    )

    @pl.when(k == kt - 1)
    def _():
        pg_ref[...] = acc_ref[...]


# ---------------------------------------------------------------------------
# pallas_call wrappers
# ---------------------------------------------------------------------------
def _fused_gram_loss(flat, style_gram, plan, inv_factor, inv_n):
    c, l = flat.shape
    tile_l, kt = plan["tile_l"], plan["kt_total"]
    needs_mask = (kt * tile_l != l)
    itemsize = jnp.dtype(flat.dtype).itemsize

    kernel = functools.partial(
        _gram_loss_kernel, total_l=l, tile_l=tile_l,
        inv_factor=inv_factor, inv_n=inv_n, needs_mask=needs_mask)

    cost = pl.CostEstimate(
        flops=2 * c * c * kt * tile_l,
        bytes_accessed=c * l * itemsize + 2 * c * c * 4 + 4,
        transcendentals=0)

    gram, loss = pl.pallas_call(
        kernel,
        out_shape=(jax.ShapeDtypeStruct((c, c), jnp.float32),
                   jax.ShapeDtypeStruct((1, 1), jnp.float32)),
        grid_spec=pltpu.PrefetchScalarGridSpec(
            num_scalar_prefetch=0,
            grid=(kt,),
            in_specs=[
                _feature_spec(c, tile_l, lambda k: (0, k), plan["num_buffers"]),
                pl.BlockSpec((c, c), lambda k: (0, 0)),
            ],
            out_specs=[
                pl.BlockSpec((c, c), lambda k: (0, 0)),
                pl.BlockSpec((1, 1), lambda k: (0, 0)),
            ],
            scratch_shapes=[pltpu.VMEM((c, c), jnp.float32)],
        ),
        compiler_params=pltpu.CompilerParams(
            dimension_semantics=("arbitrary",),
            vmem_limit_bytes=plan["vmem_limit"]),
        cost_estimate=cost,
    )(flat, style_gram)
    return gram, loss[0, 0]


def _split_partial_grams(flat, plan):
    c, l = flat.shape
    tile_l, kt = plan["tile_l"], plan["kt"]
    num_splits, kt_total = plan["num_splits"], plan["kt_total"]
    needs_mask = (num_splits * kt * tile_l != l)
    last_block = kt_total - 1
    itemsize = jnp.dtype(flat.dtype).itemsize

    def feat_map(p, k):
        # clamp so over-shot tiles re-read the last valid block (then fully masked)
        return (0, jnp.minimum(p * kt + k, last_block))

    kernel = functools.partial(
        _partial_gram_kernel, total_l=l, tile_l=tile_l, kt=kt,
        needs_mask=needs_mask)

    cost = pl.CostEstimate(
        flops=2 * c * c * num_splits * kt * tile_l,
        bytes_accessed=c * l * itemsize + num_splits * c * c * 4,
        transcendentals=0)

    core_parallel = getattr(pltpu, "CORE_PARALLEL", "parallel")
    arbitrary = getattr(pltpu, "ARBITRARY", "arbitrary")

    return pl.pallas_call(
        kernel,
        out_shape=jax.ShapeDtypeStruct((num_splits, c, c), jnp.float32),
        grid_spec=pltpu.PrefetchScalarGridSpec(
            num_scalar_prefetch=0,
            grid=(num_splits, kt),
            in_specs=[_feature_spec(c, tile_l, feat_map, plan["num_buffers"])],
            out_specs=pl.BlockSpec((None, c, c), lambda p, k: (p, 0, 0)),
            scratch_shapes=[pltpu.VMEM((c, c), jnp.float32)],
        ),
        compiler_params=pltpu.CompilerParams(
            dimension_semantics=(core_parallel, arbitrary),
            vmem_limit_bytes=plan["vmem_limit"]),
        cost_estimate=cost,
    )(flat)


# ---------------------------------------------------------------------------
# Module-level API (matches the PyTorch spec)
# ---------------------------------------------------------------------------
def _gram_and_loss(features, style_gram):
    """features: (1, C, H, W) float.  Returns (gram f32 (C,C), scalar MSE loss)."""
    b, c, h, w = features.shape
    assert b == 1, "Batch size must be 1"
    l = h * w
    flat = features.reshape(c, l)                       # reshape is free; no pad
    itemsize = jnp.dtype(flat.dtype).itemsize
    plan = _plan(c, l, itemsize)
    inv_factor = 1.0 / float(c * h * w)
    inv_n = 1.0 / float(c * c)
    sg = style_gram.astype(jnp.float32)

    if plan["num_splits"] > 1:
        # 2-TensorCore chips: per-core partial grams, tiny combine in plain jnp.
        try:
            partials = _split_partial_grams(flat, plan)
            gram = jnp.sum(partials, axis=0) * inv_factor
            loss = jnp.mean((sg - gram) ** 2)
            return gram, loss
        except Exception:
            pass  # fall back to the single-core fused path

    return _fused_gram_loss(flat, sg, plan, inv_factor, inv_n)


def get_gram_matrix(features):
    """Pallas-backed gram matrix for NCHW features with batch==1."""
    c = features.shape[1]
    gram, _ = _gram_and_loss(features, jnp.zeros((c, c), jnp.float32))
    return gram


class StyleLoss:
    """JAX/Pallas port of the PyTorch StyleLoss module."""

    def __init__(self, style_features):
        # style_features is treated as a constant ("detach")
        self.style_gram = get_gram_matrix(style_features)
        self.loss = None

    def __call__(self, x):
        # TODO(synk): self.loss is Python-side state like the PyTorch module;
        # it does not compose with jit/grad over a whole pipeline.
        _, loss = _gram_and_loss(x, self.style_gram)
        self.loss = loss
        return x  # forward is a pass-through, just like the PyTorch module


if __name__ == "__main__":
    key = jax.random.PRNGKey(0)
    k_style, k_x, k_s2, k_x2 = jax.random.split(key, 4)

    def ref_gram(f):
        _, n, h, w = f.shape
        flat = f.reshape(n, h * w).astype(jnp.float32)
        return flat @ flat.T / (n * h * w)

    # --- case 1: aligned spatial size (L = 256) -----------------------------
    C, H, W = 8, 16, 16
    style_features = jax.random.normal(k_style, (1, C, H, W), dtype=jnp.float32)
    x = jax.random.normal(k_x, (1, C, H, W), dtype=jnp.float32)

    module = StyleLoss(style_features)
    out = jax.block_until_ready(module(x))
    loss = jax.block_until_ready(module.loss)

    ref_loss = jnp.mean((ref_gram(style_features) - ref_gram(x)) ** 2)
    assert out.shape == x.shape and jnp.allclose(out, x)
    assert jnp.allclose(loss, ref_loss, rtol=1e-5, atol=1e-6), (loss, ref_loss)

    # --- case 2: ragged spatial size (L = 144, exercises in-kernel masking) --
    C2, H2, W2 = 8, 12, 12
    style2 = jax.random.normal(k_s2, (1, C2, H2, W2), dtype=jnp.float32)
    x2 = jax.random.normal(k_x2, (1, C2, H2, W2), dtype=jnp.float32)

    module2 = StyleLoss(style2)
    out2 = jax.block_until_ready(module2(x2))
    loss2 = jax.block_until_ready(module2.loss)

    ref_loss2 = jnp.mean((ref_gram(style2) - ref_gram(x2)) ** 2)
    assert out2.shape == x2.shape and jnp.allclose(out2, x2)
    assert jnp.allclose(loss2, ref_loss2, rtol=1e-5, atol=1e-6), (loss2, ref_loss2)

    print("KERNEL_OK")
</pallas_src>

<mosaic_0001>
module attributes {stable_mosaic.version = 11 : i64} {
  func.func @_gram_loss_kernel(%arg0: i32, %arg1: memref<8x256xf32, #tpu.memory_space<vmem>>, %arg2: memref<8x8xf32, #tpu.memory_space<vmem>>, %arg3: memref<8x8xf32, #tpu.memory_space<vmem>>, %arg4: memref<1x1xf32, #tpu.memory_space<vmem>>, %arg5: memref<8x8xf32, #tpu.memory_space<vmem>>) attributes {dimension_semantics = [#tpu.dimension_semantics<arbitrary>], iteration_bounds = array<i64: 1>, scalar_prefetch = 0 : i64, scratch_operands = 1 : i64, tpu.core_type = #tpu.core_type<tc>, window_params = [{transform_indices = @transform_0, window_bounds = array<i64: 8, 256>}, {pipeline_mode = #tpu.pipeline_mode<synchronous>, transform_indices = @transform_1, window_bounds = array<i64: 8, 8>}, {pipeline_mode = #tpu.pipeline_mode<synchronous>, transform_indices = @transform_2, window_bounds = array<i64: 8, 8>}, {pipeline_mode = #tpu.pipeline_mode<synchronous>, transform_indices = @transform_3, window_bounds = array<i64: 1, 1>}]} {
    %c0_i32 = arith.constant 0 : i32
    %0 = arith.cmpi eq, %arg0, %c0_i32 : i32
    %1 = arith.extui %0 : i1 to i32
    %c0_i32_0 = arith.constant 0 : i32
    %2 = arith.cmpi ne, %1, %c0_i32_0 : i32
    scf.if %2 {
      %cst_8 = arith.constant 0.000000e+00 : f32
      %11 = vector.broadcast %cst_8 : f32 to vector<8x8xf32>
      %c0_9 = arith.constant 0 : index
      %c0_10 = arith.constant 0 : index
      %12 = vector.load %arg5[%c0_9, %c0_10] : memref<8x8xf32, #tpu.memory_space<vmem>>, vector<8x8xf32>
      tpu.vector_store %arg5[%c0_9, %c0_10], %11 {strides = array<i32>} : memref<8x8xf32, #tpu.memory_space<vmem>>, vector<8x8xf32>,
    } else {
    }
    %c0 = arith.constant 0 : index
    %c0_1 = arith.constant 0 : index
    %3 = vector.load %arg1[%c0, %c0_1] : memref<8x256xf32, #tpu.memory_space<vmem>>, vector<8x256xf32>
    %c0_2 = arith.constant 0 : index
    %c0_3 = arith.constant 0 : index
    %4 = vector.load %arg5[%c0_2, %c0_3] : memref<8x8xf32, #tpu.memory_space<vmem>>, vector<8x8xf32>
    %cst = arith.constant dense<0.000000e+00> : vector<8x8xf32>
    %5 = tpu.matmul %3, %3, %cst {dimension_numbers = #tpu.dot_dimension_numbers<[1], [1], [0], [0], [0, 0, 1, 0], [], []>} : vector<8x256xf32>, vector<8x256xf32>, vector<8x8xf32> -> vector<8x8xf32>
    %6 = arith.addf %4, %5 : vector<8x8xf32>
    %c0_4 = arith.constant 0 : index
    %c0_5 = arith.constant 0 : index
    %7 = vector.load %arg5[%c0_4, %c0_5] : memref<8x8xf32, #tpu.memory_space<vmem>>, vector<8x8xf32>
    tpu.vector_store %arg5[%c0_4, %c0_5], %6 {strides = array<i32>} : memref<8x8xf32, #tpu.memory_space<vmem>>, vector<8x8xf32>,
    %c0_i32_6 = arith.constant 0 : i32
    %8 = arith.cmpi eq, %arg0, %c0_i32_6 : i32
    %9 = arith.extui %8 : i1 to i32
    %c0_i32_7 = arith.constant 0 : i32
    %10 = arith.cmpi ne, %9, %c0_i32_7 : i32
    scf.if %10 {
      %c0_8 = arith.constant 0 : index
      %c0_9 = arith.constant 0 : index
      %11 = vector.load %arg5[%c0_8, %c0_9] : memref<8x8xf32, #tpu.memory_space<vmem>>, vector<8x8xf32>
      %cst_10 = arith.constant 4.8828125E-4 : f32
      %12 = vector.broadcast %cst_10 : f32 to vector<8x8xf32>
      %13 = arith.mulf %11, %12 : vector<8x8xf32>
      %c0_11 = arith.constant 0 : index
      %c0_12 = arith.constant 0 : index
      %14 = vector.load %arg3[%c0_11, %c0_12] : memref<8x8xf32, #tpu.memory_space<vmem>>, vector<8x8xf32>
      tpu.vector_store %arg3[%c0_11, %c0_12], %13 {strides = array<i32>} : memref<8x8xf32, #tpu.memory_space<vmem>>, vector<8x8xf32>,
      %c0_13 = arith.constant 0 : index
      %c0_14 = arith.constant 0 : index
      %15 = vector.load %arg2[%c0_13, %c0_14] : memref<8x8xf32, #tpu.memory_space<vmem>>, vector<8x8xf32>
      %16 = arith.subf %15, %13 : vector<8x8xf32>
      %17 = arith.mulf %16, %16 : vector<8x8xf32>
      %18 = vector.shape_cast %17 : vector<8x8xf32> to vector<1x8x8xf32>
      %cst_15 = arith.constant dense<0.000000e+00> : vector<1xf32>
      %19 = vector.multi_reduction <add>, %18, %cst_15 [1, 2] : vector<1x8x8xf32> to vector<1xf32>
      %20 = vector.shape_cast %19 : vector<1xf32> to vector<1x1x1xf32>
      %21 = vector.extract %20[0, 0, 0] : f32 from vector<1x1x1xf32>
      %22 = vector.broadcast %21 : f32 to vector<1x1xf32>
      %cst_16 = arith.constant 1.562500e-02 : f32
      %23 = vector.broadcast %cst_16 : f32 to vector<1x1xf32>
      %24 = arith.mulf %22, %23 : vector<1x1xf32>
      %c0_17 = arith.constant 0 : index
      %c0_18 = arith.constant 0 : index
      %25 = vector.load %arg4[%c0_17, %c0_18] : memref<1x1xf32, #tpu.memory_space<vmem>>, vector<1x1xf32>
      tpu.vector_store %arg4[%c0_17, %c0_18], %24 {strides = array<i32>} : memref<1x1xf32, #tpu.memory_space<vmem>>, vector<1x1xf32>,
    } else {
    }
    return
  }
  func.func @transform_0(%arg0: i32) -> (i32, i32) {
    %c0_i32 = arith.constant 0 : i32
    %c0_i32_0 = arith.constant 0 : i32
    return %c0_i32, %arg0 : i32, i32
  }
  func.func @transform_1(%arg0: i32) -> (i32, i32) {
    %c0_i32 = arith.constant 0 : i32
    %c0_i32_0 = arith.constant 0 : i32
    %c0_i32_1 = arith.constant 0 : i32
    return %c0_i32, %c0_i32_0 : i32, i32
  }
  func.func @transform_2(%arg0: i32) -> (i32, i32) {
    %c0_i32 = arith.constant 0 : i32
    %c0_i32_0 = arith.constant 0 : i32
    %c0_i32_1 = arith.constant 0 : i32
    return %c0_i32, %c0_i32_0 : i32, i32
  }
  func.func @transform_3(%arg0: i32) -> (i32, i32) {
    %c0_i32 = arith.constant 0 : i32
    %c0_i32_0 = arith.constant 0 : i32
    %c0_i32_1 = arith.constant 0 : i32
    return %c0_i32, %c0_i32_0 : i32, i32
  }
}

</mosaic_0001>

<llo_original>
// kernel: tpu_custom_call.1
$region0: #{tpu_custom_call.1}
  #allocation0 [shape = 'u32[]', space=smem, size = 0x4, offset = 0x4, fixed_abs, tag = 'smem constant byte address 0x4 - core index']
  #allocation1 [shape = 'u32[144,128]{1,0:T(1,128)}', space=vmem, size = 0x12000, scoped, tag = 'internal scratch']
  #allocation2 [shape = 'f32[8,8]{1,0:T(8,128)}', space=vmem, size = 0x1000, scoped, tag = 'scratch operand']
  %s0 = inlined_call_operand.hbm [shape: f32[8,256], index: 0, kind: input, shape index: {}]
  %s1 = inlined_call_operand.hbm [shape: f32[8,8], index: 1, kind: input, shape index: {}]
  %s2 = inlined_call_operand.hbm [shape: f32[8,8], index: 2, kind: output, shape index: {0}]
  %s3 = inlined_call_operand.hbm [shape: f32[1,1], index: 3, kind: output, shape index: {1}]
  %4 = xla_tuple %s2, %s3
  %s5 = sld [smem:[#allocation0]]
  $region42: #{tpu_custom_call.1} parent=0
    _
  %s7 = ssub.s32 1, %s5
  %s8 = scalar_select 0, %s7, %s5
  $region1: #{tpu_custom_call.1} parent=0
    #allocation3 [shape = 'u8[8192]{0}', space=vmem, size = 0x2000, scoped, tag = 'input window, operand 0, single buffered']
    #allocation4 [shape = 's32[1]{0}', space=sflag, size = 0x4, scoped, tag = 'scoped memory for tpu_custom_call.1']
    #allocation5 [shape = 's32[1]{0}', space=sflag, size = 0x4, scoped, tag = 'scoped memory for tpu_custom_call.1']
    #allocation6 [shape = 'u8[4096]{0}', space=vmem, size = 0x1000, scoped, tag = 'input window, operand 1, single buffered']
    #allocation7 [shape = 's32[1]{0}', space=sflag, size = 0x4, scoped, tag = 'scoped memory for tpu_custom_call.1']
    #allocation8 [shape = 'u8[4096]{0}', space=vmem, size = 0x1000, scoped, tag = 'output window, operand 0, single buffered']
    #allocation9 [shape = 'u8[512]{0}', space=vmem, size = 0x400, scoped, tag = 'output window, operand 1, single buffered']
    #allocation10 [shape = 's32[1]{0}', space=sflag, size = 0x4, scoped, tag = 'scoped memory for tpu_custom_call.1']
    %9 = vsyncpa [#allocation4], 0
    %10 = vsyncpa [#allocation7], 0
    %11 = vsyncpa [#allocation5], 0
    %12 = vsyncpa [#allocation10], 0
    // Predicated region
    $region2: #{tpu_custom_call.1} parent=1 // pred_check
      _
    $region3: #{tpu_custom_call.1} parent=1 // pred_check_branch
      %14 = sbr.rel (0) target = $region5
    $region4: #{tpu_custom_call.1} parent=1 // pred_region
      %s16 = ssub.s32 256, 256
      %17 = vsyncadd [#allocation4], %s16
      %s19 = sshll.u32 [#allocation3], 4
      %s20 = int_to_ptr.vmem [resolvable:$true] %s19
      %22 = dma.hbm_to_vmem [thread:$0]  %s0, 256, %s20, [#allocation4]
    $region5: #{tpu_custom_call.1} parent=1 // pred_fallthru
      _
    // Predicated region
    $region6: #{tpu_custom_call.1} parent=1 // pred_check
      _
    $region7: #{tpu_custom_call.1} parent=1 // pred_check_branch
      %24 = sbr.rel (0) target = $region9
    $region8: #{tpu_custom_call.1} parent=1 // pred_region
      %s26 = ssub.s32 128, 128
      %27 = vsyncadd [#allocation7], %s26
      %s29 = sshll.u32 [#allocation6], 4
      %s30 = int_to_ptr.vmem [resolvable:$true] %s29
      %32 = dma.hbm_to_vmem [thread:$0]  %s1, 128, %s30, [#allocation7]
    $region9: #{tpu_custom_call.1} parent=1 // pred_fallthru
      _
    // Predicated region
    $region10: #{tpu_custom_call.1} parent=1 // pred_check
      _
    $region11: #{tpu_custom_call.1} parent=1 // pred_check_branch
      %34 = sbr.rel (0) target = $region13
    $region12: #{tpu_custom_call.1} parent=1 // pred_region
      %35 = dma.done [#allocation4], 256
    $region13: #{tpu_custom_call.1} parent=1 // pred_fallthru
      _
    // Predicated region
    $region14: #{tpu_custom_call.1} parent=1 // pred_check
      _
    $region15: #{tpu_custom_call.1} parent=1 // pred_check_branch
      %37 = sbr.rel (0) target = $region17
    $region16: #{tpu_custom_call.1} parent=1 // pred_region
      %38 = dma.done [#allocation7], 128
    $region17: #{tpu_custom_call.1} parent=1 // pred_fallthru
      _
    %p39 = scmp.eq.s32.totalorder 0, 0
    // Predicated region
    $region18: #{tpu_custom_call.1} parent=1 // pred_check
      %p40 = pneg %p39
    $region19: #{tpu_custom_call.1} parent=1 // pred_check_branch
      %42 = sbr.rel (%p40) target = $region21
    $region20: #{tpu_custom_call.1} parent=1 // pred_region
      %vm43 = vcmask 64512
      %44 = vst.msk [vmem:[#allocation2] sm:$0xff] %vm43, 0.0
    $region21: #{tpu_custom_call.1} parent=1 // pred_fallthru
      _
    %v45 = vld [vmem:[#allocation3] sm:$0xff]
    %v46 = vld [vmem:[#allocation3 + $0x8] sm:$0xff]
    %v47 = vld [vmem:[#allocation2] sm:$0xff]
    %48 = vmatprep.subr.mxu0 %v46
    %49 = vmatpush1.xpose.msra.mxu0 %v45
    %50 = vmatprep.subr.mxu0 0.0
    %51 = vmatpush1.xpose.msra.mxu0 0.0
    %52 = vmatprep.subr.mxu0 0.0
    %53 = vmatpush1.xpose.msra.mxu0 0.0
    %54 = vmatprep.subr.mxu0 0.0
    %55 = vmatpush1.xpose.msra.mxu0 0.0
    %56 = vmatprep.subr.mxu0 0.0
    %57 = vmatpush1.xpose.msra.mxu0 0.0
    %58 = vmatprep.subr.mxu0 0.0
    %59 = vmatpush1.xpose.msra.mxu0 0.0
    %60 = vmatprep.subr.mxu0 0.0
    %61 = vmatpush1.xpose.msra.mxu0 0.0
    %62 = vmatprep.subr.mxu0 0.0
    %63 = vmatpush1.xpose.msra.mxu0 0.0
    %64 = vmatprep.subr.mxu0 0.0
    %65 = vmatpush1.xpose.msra.mxu0 0.0
    %66 = vmatprep.subr.mxu0 0.0
    %67 = vmatpush1.xpose.msra.mxu0 0.0
    %68 = vmatprep.subr.mxu0 0.0
    %69 = vmatpush1.xpose.msra.mxu0 0.0
    %70 = vmatprep.subr.mxu0 0.0
    %71 = vmatpush1.xpose.msra.mxu0 0.0
    %72 = vmatprep.subr.mxu0 0.0
    %73 = vmatpush1.xpose.msra.mxu0 0.0
    %74 = vmatprep.subr.mxu0 0.0
    %75 = vmatpush1.xpose.msra.mxu0 0.0
    %76 = vmatprep.subr.mxu0 0.0
    %77 = vmatpush1.xpose.msra.mxu0 0.0
    %78 = vmatprep.subr.mxu0 0.0
    %79 = vmatpush1.xpose.msra.mxu0 0.0
    %80 = vmatprep.subr.mxu0 0.0
    %81 = vmatpush1.xpose.msra.mxu0 0.0
    %82 = vmatprep.subr.mxu0 0.0
    %83 = vmatpush1.xpose.msra.mxu0 0.0
    %84 = vmatprep.subr.mxu0 0.0
    %85 = vmatpush1.xpose.msra.mxu0 0.0
    %86 = vmatprep.subr.mxu0 0.0
    %87 = vmatpush1.xpose.msra.mxu0 0.0
    %88 = vmatprep.subr.mxu0 0.0
    %89 = vmatpush1.xpose.msra.mxu0 0.0
    %90 = vmatprep.subr.mxu0 0.0
    %91 = vmatpush1.xpose.msra.mxu0 0.0
    %92 = vmatprep.subr.mxu0 0.0
    %93 = vmatpush1.xpose.msra.mxu0 0.0
    %94 = vmatprep.subr.mxu0 0.0
    %95 = vmatpush1.xpose.msra.mxu0 0.0
    %96 = vmatprep.subr.mxu0 0.0
    %97 = vmatpush1.xpose.msra.mxu0 0.0
    %98 = vmatprep.subr.mxu0 0.0
    %99 = vmatpush1.xpose.msra.mxu0 0.0
    %100 = vmatprep.subr.mxu0 0.0
    %101 = vmatpush1.xpose.msra.mxu0 0.0
    %102 = vmatprep.subr.mxu0 0.0
    %103 = vmatpush1.xpose.msra.mxu0 0.0
    %104 = vmatprep.subr.mxu0 0.0
    %105 = vmatpush1.xpose.msra.mxu0 0.0
    %106 = vmatprep.subr.mxu0 0.0
    %107 = vmatpush1.xpose.msra.mxu0 0.0
    %108 = vmatprep.subr.mxu0 0.0
    %109 = vmatpush1.xpose.msra.mxu0 0.0
    %110 = vmatprep.subr.mxu0 0.0
    %111 = vmatpush1.xpose.msra.mxu0 0.0
    %112 = vmatprep.mubr.f32.mxu0 %v46
    %113 = vmatmul.mubr.f32.gmra.mrb[0].mxu0 %v45
    %v114 = vpop.f32.mrb[0].mxu0
    %v115 = vadd.f32 0.0, %v114
    %v116 = vpop.f32.mrb[0].mxu0
    %117 = vdwg.mxu0
    %v118 = vadd.f32 %v47, %v115
    %vm119 = vcmask 64512
    %120 = vst.msk [vmem:[#allocation2] sm:$0xff] %vm119, %v118
    // Predicated region
    $region22: #{tpu_custom_call.1} parent=1 // pred_check
      %p121 = pneg %p39
    $region23: #{tpu_custom_call.1} parent=1 // pred_check_branch
      %123 = sbr.rel (%p121) target = $region25
    $region24: #{tpu_custom_call.1} parent=1 // pred_region
      %v124 = vld [vmem:[#allocation2] sm:$0xff]
      %v125 = vmul.f32 %v124, 0.00048828125
      %126 = vst.msk [vmem:[#allocation8] sm:$0xff] %vm119, %v125
      %v127 = vld [vmem:[#allocation6] sm:$0xff]
      %v128 = vsub.f32 %v127, %v125
      %v129 = vmul.f32 %v128, %v128
      %v130 = vsel %vm119, %v129, 0.0
      %131 = vadd.xlane.f32.xlu0 %v130
      %v132 = vpop.xlane.xlu0 %131
      %v133 = vrot.slane %v132, 4
      %v134 = vadd.f32 %v132, %v133
      %v135 = vrot.slane %v134, 2
      %v136 = vadd.f32 %v134, %v135
      %v137 = vrot.slane %v136, 1
      %v138 = vadd.f32 %v136, %v137
      %s139 = vtos %v138
      %v140 = vstv %s139
      %v141 = vmul.f32 %v140, 0.015625
      %vm142 = vcmask 0
      %143 = vst.msk [vmem:[#allocation9] sm:$0x1] %vm142, %v141
    $region25: #{tpu_custom_call.1} parent=1 // pred_fallthru
      _
    // Predicated region
    $region26: #{tpu_custom_call.1} parent=1 // pred_check
      _
    $region27: #{tpu_custom_call.1} parent=1 // pred_check_branch
      %145 = sbr.rel (0) target = $region29
    $region28: #{tpu_custom_call.1} parent=1 // pred_region
      %s147 = ssub.s32 128, 128
      %148 = vsyncadd [#allocation5], %s147
      %s150 = sshll.u32 [#allocation8], 4
      %s151 = int_to_ptr.vmem [resolvable:$true] %s150
      %153 = dma.vmem_to_hbm [thread:$0]  %s151, 128, %s2, [#allocation5]
    $region29: #{tpu_custom_call.1} parent=1 // pred_fallthru
      _
    // Predicated region
    $region30: #{tpu_custom_call.1} parent=1 // pred_check
      _
    $region31: #{tpu_custom_call.1} parent=1 // pred_check_branch
      %155 = sbr.rel (0) target = $region33
    $region32: #{tpu_custom_call.1} parent=1 // pred_region
      %s157 = ssub.s32 16, 16
      %158 = vsyncadd [#allocation10], %s157
      %s160 = sshll.u32 [#allocation9], 4
      %s161 = int_to_ptr.vmem [resolvable:$true] %s160
      %163 = dma.vmem_to_hbm [thread:$0]  %s161, 16, %s3, [#allocation10]
    $region33: #{tpu_custom_call.1} parent=1 // pred_fallthru
      _
    // Predicated region
    $region34: #{tpu_custom_call.1} parent=1 // pred_check
      _
    $region35: #{tpu_custom_call.1} parent=1 // pred_check_branch
      %165 = sbr.rel (0) target = $region37
    $region36: #{tpu_custom_call.1} parent=1 // pred_region
      %166 = dma.done [#allocation5], 128
    $region37: #{tpu_custom_call.1} parent=1 // pred_fallthru
      _
    // Predicated region
    $region38: #{tpu_custom_call.1} parent=1 // pred_check
      _
    $region39: #{tpu_custom_call.1} parent=1 // pred_check_branch
      %168 = sbr.rel (0) target = $region41
    $region40: #{tpu_custom_call.1} parent=1 // pred_region
      %169 = dma.done [#allocation10], 16
    $region41: #{tpu_custom_call.1} parent=1 // pred_fallthru
      _
    %170 = vsyncpa [#allocation4], 1
    %171 = vsyncpa [#allocation7], 1
    %172 = vsyncpa [#allocation5], 1
    %173 = vsyncpa [#allocation10], 1

</llo_original>
